<compile_context>
chip_gen: v7x
topology: tpu7x:2x2x1
jax: 0.10.0
libtpu: 0.0.40
codegen_flags: <defaults>
</compile_context>

<pallas_src>
import jax
import jax.numpy as jnp
from jax import lax
from jax.experimental import pallas as pl
from jax.experimental.pallas import tpu as pltpu

KH = KW = 28  # Conv2d kernel_size=(28, 28)


def _conv_relu_kernel(x_ref, w_ref, b_ref, o_ref):
    # x_ref: (TM, K)            one flattened image per row (OH = OW = 1)
    # w_ref: (1, K)             flattened conv weight, (C, KH, KW) row-major
    # b_ref: (1,)               bias scalar (SMEM)
    # o_ref: (1, TM//128, 128)  lane-dense output slab for this row tile
    g = o_ref.shape[1]                        # TM // 128
    k = x_ref.shape[-1]
    x = x_ref[...].reshape(g, 128, k)         # layout-free row regrouping
    w = w_ref[...].reshape(1, 1, k)
    acc = jnp.sum(x * w, axis=-1)             # VPU mul + lane reduce -> (g, 128)
    o_ref[...] = jnp.maximum(acc + b_ref[0], 0.0)[None]   # + bias, ReLU(inplace)


def cnn_forward(x, w, b, *, tm=1024):
    """x: (N, C, 28, 28) f32, w: (1, C, 28, 28) f32, b: (1,) f32 -> (N, 1) f32.

    tm must be a multiple of 128.  The default 1024 keeps the double-buffered
    activation tiles at ~6.5 MiB VMEM (safe even for v5e's 16 MiB scoped
    default); it is shrunk automatically for small batches.
    """
    N, C, H, W = x.shape
    # TODO(synk): this model only ever sees 28x28 inputs (OH = OW = 1); general
    # spatial sizes would need an im2col path that is not implemented here.
    assert (H, W) == (KH, KW), "28x28 valid conv on this model implies H=W=28"
    K = C * KH * KW
    M = N  # N * OH * OW with OH = OW = 1

    x2d = x.reshape(M, K)   # identity "im2col": metadata-only reshape, no HBM copy
    w2d = w.reshape(1, K)   # OIHW flatten matches the row-major x reshape

    tm = max(128, min(tm, pl.cdiv(M, 128) * 128))  # don't over-read tiny batches
    g = tm // 128
    n_tiles = pl.cdiv(M, tm)                       # ragged tail handled by Pallas

    out = pl.pallas_call(
        _conv_relu_kernel,
        out_shape=jax.ShapeDtypeStruct((n_tiles, g, 128), jnp.float32),
        grid=(n_tiles,),
        in_specs=[
            pl.BlockSpec((tm, K), lambda i: (i, 0)),            # streamed rows
            pl.BlockSpec((1, K), lambda i: (0, 0)),             # resident weight
            pl.BlockSpec(memory_space=pltpu.MemorySpace.SMEM),  # bias scalar
        ],
        out_specs=pl.BlockSpec((1, g, 128), lambda i: (i, 0, 0)),
        compiler_params=pltpu.CompilerParams(
            dimension_semantics=("parallel",)),
    )(x2d, w2d, b)

    # features.view(N, -1) with OH*OW == 1; padded tail rows (>= M) are dropped.
    return out.reshape(-1)[:M].reshape(N, 1)


if __name__ == "__main__":
    # size (= in_channels) = 1, MNIST-like 28x28 inputs.  Batch 300 with a
    # 128-row tile exercises a 3-step pipelined grid including a ragged tail.
    N, C, H, W = 300, 1, 28, 28
    key = jax.random.PRNGKey(0)
    kx, kw, kb = jax.random.split(key, 3)

    x = jax.random.normal(kx, (N, C, H, W), jnp.float32)

    # Deterministic Conv2d-style init: U(-1/sqrt(fan_in), 1/sqrt(fan_in)).
    fan_in = C * KH * KW
    bound = 1.0 / (fan_in ** 0.5)
    w = jax.random.uniform(kw, (1, C, KH, KW), jnp.float32, -bound, bound)
    b = jax.random.uniform(kb, (1,), jnp.float32, -bound, bound)

    out = jax.block_until_ready(cnn_forward(x, w, b, tm=128))

    # Reference check against XLA conv (same semantics as the PyTorch module).
    ref = lax.conv_general_dilated(
        x, w, (1, 1), "VALID",
        dimension_numbers=("NCHW", "OIHW", "NCHW")) + b.reshape(1, 1, 1, 1)
    ref = jnp.maximum(ref, 0.0).reshape(N, -1)
    assert out.shape == ref.shape, (out.shape, ref.shape)
    assert jnp.allclose(out, ref, atol=1e-4, rtol=1e-4)

    print("KERNEL_OK")
</pallas_src>

<mosaic_0001>
module attributes {stable_mosaic.version = 11 : i64} {
  func.func @_conv_relu_kernel(%arg0: i32, %arg1: memref<128x784xf32, #tpu.memory_space<vmem>>, %arg2: memref<1x784xf32, #tpu.memory_space<vmem>>, %arg3: memref<1xf32, #tpu.memory_space<smem>>, %arg4: memref<1x1x128xf32, #tpu.memory_space<vmem>>) attributes {dimension_semantics = [#tpu.dimension_semantics<parallel>], iteration_bounds = array<i64: 3>, scalar_prefetch = 0 : i64, scratch_operands = 0 : i64, tpu.core_type = #tpu.core_type<tc>, window_params = [{transform_indices = @transform_0, window_bounds = array<i64: 128, 784>}, {pipeline_mode = #tpu.pipeline_mode<synchronous>, transform_indices = @transform_1, window_bounds = array<i64: 1, 784>}, {transform_indices = @transform_2, window_bounds = array<i64: 1>}, {transform_indices = @transform_3, window_bounds = array<i64: 1, 1, 128>}]} {
    %c0 = arith.constant 0 : index
    %c0_0 = arith.constant 0 : index
    %0 = vector.load %arg1[%c0, %c0_0] : memref<128x784xf32, #tpu.memory_space<vmem>>, vector<128x784xf32>
    %1 = vector.shape_cast %0 : vector<128x784xf32> to vector<1x128x784xf32>
    %c0_1 = arith.constant 0 : index
    %c0_2 = arith.constant 0 : index
    %2 = vector.load %arg2[%c0_1, %c0_2] : memref<1x784xf32, #tpu.memory_space<vmem>>, vector<1x784xf32>
    %3 = vector.shape_cast %2 : vector<1x784xf32> to vector<1x1x784xf32>
    %4 = vector.broadcast %3 : vector<1x1x784xf32> to vector<1x128x784xf32>
    %5 = arith.mulf %1, %4 : vector<1x128x784xf32>
    %cst = arith.constant dense<0.000000e+00> : vector<1x128xf32>
    %6 = vector.multi_reduction <add>, %5, %cst [2] : vector<1x128x784xf32> to vector<1x128xf32>
    %c0_3 = arith.constant 0 : index
    %7 = memref.load %arg3[%c0_3] : memref<1xf32, #tpu.memory_space<smem>>
    %8 = vector.broadcast %7 : f32 to vector<1x128xf32>
    %9 = arith.addf %6, %8 : vector<1x128xf32>
    %cst_4 = arith.constant 0.000000e+00 : f32
    %10 = vector.broadcast %cst_4 : f32 to vector<1x128xf32>
    %11 = arith.maximumf %9, %10 : vector<1x128xf32>
    %12 = vector.shape_cast %11 : vector<1x128xf32> to vector<1x1x128xf32>
    %c0_5 = arith.constant 0 : index
    %c0_6 = arith.constant 0 : index
    %c0_7 = arith.constant 0 : index
    %13 = vector.load %arg4[%c0_5, %c0_6, %c0_7] : memref<1x1x128xf32, #tpu.memory_space<vmem>>, vector<1x1x128xf32>
    tpu.vector_store %arg4[%c0_5, %c0_6, %c0_7], %12 {strides = array<i32>} : memref<1x1x128xf32, #tpu.memory_space<vmem>>, vector<1x1x128xf32>,
    return
  }
  func.func @transform_0(%arg0: i32) -> (i32, i32) {
    %c0_i32 = arith.constant 0 : i32
    %c0_i32_0 = arith.constant 0 : i32
    return %arg0, %c0_i32 : i32, i32
  }
  func.func @transform_1(%arg0: i32) -> (i32, i32) {
    %c0_i32 = arith.constant 0 : i32
    %c0_i32_0 = arith.constant 0 : i32
    %c0_i32_1 = arith.constant 0 : i32
    return %c0_i32, %c0_i32_0 : i32, i32
  }
  func.func @transform_2(%arg0: i32) -> i32 {
    %c0_i32 = arith.constant 0 : i32
    %c0_i32_0 = arith.constant 0 : i32
    return %c0_i32 : i32
  }
  func.func @transform_3(%arg0: i32) -> (i32, i32, i32) {
    %c0_i32 = arith.constant 0 : i32
    %c0_i32_0 = arith.constant 0 : i32
    %c0_i32_1 = arith.constant 0 : i32
    return %arg0, %c0_i32, %c0_i32_0 : i32, i32, i32
  }
}

</mosaic_0001>

<llo_original>
// kernel: tpu_custom_call.1
$region0: #{tpu_custom_call.1}
  #allocation0 [shape = 'u32[]', space=smem, size = 0x4, offset = 0x4, fixed_abs, tag = 'smem constant byte address 0x4 - core index']
  #allocation1 [shape = 'u32[144,128]{1,0:T(1,128)}', space=vmem, size = 0x12000, scoped, tag = 'internal scratch']
  #allocation2 [shape = 'f32[1]{0:T(128)S(6)}', space=smem, size = 0x200, scoped, tag = 'scoped memory for tpu_custom_call.1']
  %s0 = inlined_call_operand.hbm [shape: f32[300,784], index: 0, kind: input, shape index: {}]
  %s1 = inlined_call_operand.hbm [shape: f32[1,784], index: 1, kind: input, shape index: {}]
  %s2 = inlined_call_operand.<no memory space> [shape: f32[1], index: 2, kind: input, shape index: {}]
  %s3 = inlined_call_operand.hbm [shape: f32[3,1,128], index: 3, kind: output, shape index: {}]
  %s4 = sld [smem:[#allocation0]]
  $region53: #{tpu_custom_call.1} parent=0
    _
  %s6 = ssub.s32 1, %s4
  %s7 = scalar_select 0, %s6, %s4
  %8 = sst [smem:[#allocation2]] %s2
  $region1: #{tpu_custom_call.1} parent=0
    #allocation3 [shape = 'u8[917504]{0}', space=vmem, size = 0xe0000, scoped, tag = 'input window, operand 0']
    #allocation4 [shape = 's32[2]{0}', space=sflag, size = 0x8, scoped, tag = 'scoped memory for tpu_custom_call.1']
    #allocation5 [shape = 's32[2]{0}', space=sflag, size = 0x8, scoped, tag = 'scoped memory for tpu_custom_call.1']
    #allocation6 [shape = 'u8[3584]{0}', space=vmem, size = 0x1000, scoped, tag = 'input window, operand 1, single buffered']
    #allocation7 [shape = 's32[1]{0}', space=sflag, size = 0x4, scoped, tag = 'scoped memory for tpu_custom_call.1']
    #allocation8 [shape = 'u8[1024]{0}', space=vmem, size = 0x400, scoped, tag = 'output window, operand 0']
    %9 = vsyncpa [#allocation4], 0
    %s10 = scalar_lea.sflag [#allocation4], 1
    %11 = vsyncpa %s10, 0
    %12 = vsyncpa [#allocation7], 0
    %13 = vsyncpa [#allocation5], 0
    %s14 = scalar_lea.sflag [#allocation5], 1
    %15 = vsyncpa %s14, 0
    loop: start=0, step=1, limit=5
    $region2: #{tpu_custom_call.1} parent=1 // loop_pre_header
      _
    $region3: #{tpu_custom_call.1} parent=1 // loop_header
      %s17 = sphi 0, %s21
      %p18 = scmp.ge.s32.totalorder %s17, 5
      %s27 = sphi 0, %s29
      %s30 = sphi 0, %s27
      %s31 = sphi 0, %s30
      %s47 = sphi 0, %s31
      %s51 = sphi 0, %s51
      %s53 = sphi 0, %s51
      %s54 = sphi 0, %s53
      %s68 = sphi 0, %s54
      %s72 = sphi 0, %s72
      %s74 = sphi 0, %s72
      %s75 = sphi 0, %s74
      %s89 = sphi 0, %s75
      %s95 = sphi 0, %s97
      %s98 = sphi 0, %s95
      %s99 = sphi 0, %s98
      %s115 = sphi 0, %s99
    $region4: #{tpu_custom_call.1} parent=1 // loop_header_branch
      %20 = sbr.rel (%p18) target = $region8
    $region5: #{tpu_custom_call.1} parent=1 // loop_body
      %s22 = ssub.s32 %s17, 1
      %s23 = ssub.s32 %s17, 2
      %s24 = sadd.s32 %s17, 1
      %s25 = ssub.s32 %s17, %s24
      %p26 = scmp.eq.s32.totalorder %s25, 0
      %s28 = sadd.s32 %s27, 1
      %s29 = scalar_select %p26, %s27, %s28
      %p32 = pneg %p26
      %p33 = scmp.eq.s32.totalorder %s17, 2
      %p34 = por %p32, %p33
      %p35 = scmp.ne.s32.totalorder %s27, %s30
      %p36 = scmp.eq.s32.totalorder %s17, 0
      %p37 = por %p35, %p36
      %p38 = scmp.ne.s32.totalorder %s27, %s30
      %p39 = scmp.eq.s32.totalorder %s22, 2
      %p40 = por %p38, %p39
      %p41 = scmp.ne.s32.totalorder %s30, %s31
      %p42 = scmp.eq.s32.totalorder %s22, 0
      %p43 = por %p41, %p42
      %p44 = scmp.ne.s32.totalorder %s30, %s31
      %p45 = scmp.eq.s32.totalorder %s23, 2
      %p46 = por %p44, %p45
      %p48 = scmp.ne.s32.totalorder %s31, %s47
      %p49 = scmp.eq.s32.totalorder %s23, 0
      %p50 = por %p48, %p49
      %s52 = sadd.s32 %s51, 1
      %p55 = scmp.eq.s32.totalorder %s17, 2
      %p56 = scmp.ne.s32.totalorder %s51, %s53
      %p57 = scmp.eq.s32.totalorder %s17, 0
      %p58 = por %p56, %p57
      %p59 = scmp.ne.s32.totalorder %s51, %s53
      %p60 = scmp.eq.s32.totalorder %s22, 2
      %p61 = por %p59, %p60
      %p62 = scmp.ne.s32.totalorder %s53, %s54
      %p63 = scmp.eq.s32.totalorder %s22, 0
      %p64 = por %p62, %p63
      %p65 = scmp.ne.s32.totalorder %s53, %s54
      %p66 = scmp.eq.s32.totalorder %s23, 2
      %p67 = por %p65, %p66
      %p69 = scmp.ne.s32.totalorder %s54, %s68
      %p70 = scmp.eq.s32.totalorder %s23, 0
      %p71 = por %p69, %p70
      %s73 = sadd.s32 %s72, 1
      %p76 = scmp.eq.s32.totalorder %s17, 2
      %p77 = scmp.ne.s32.totalorder %s72, %s74
      %p78 = scmp.eq.s32.totalorder %s17, 0
      %p79 = por %p77, %p78
      %p80 = scmp.ne.s32.totalorder %s72, %s74
      %p81 = scmp.eq.s32.totalorder %s22, 2
      %p82 = por %p80, %p81
      %p83 = scmp.ne.s32.totalorder %s74, %s75
      %p84 = scmp.eq.s32.totalorder %s22, 0
      %p85 = por %p83, %p84
      %p86 = scmp.ne.s32.totalorder %s74, %s75
      %p87 = scmp.eq.s32.totalorder %s23, 2
      %p88 = por %p86, %p87
      %p90 = scmp.ne.s32.totalorder %s75, %s89
      %p91 = scmp.eq.s32.totalorder %s23, 0
      %p92 = por %p90, %p91
      %s93 = ssub.s32 %s17, %s24
      %p94 = scmp.eq.s32.totalorder %s93, 0
      %s96 = sadd.s32 %s95, 1
      %s97 = scalar_select %p94, %s95, %s96
      %p100 = pneg %p94
      %p101 = scmp.eq.s32.totalorder %s17, 2
      %p102 = por %p100, %p101
      %p103 = scmp.ne.s32.totalorder %s95, %s98
      %p104 = scmp.eq.s32.totalorder %s17, 0
      %p105 = por %p103, %p104
      %p106 = scmp.ne.s32.totalorder %s95, %s98
      %p107 = scmp.eq.s32.totalorder %s22, 2
      %p108 = por %p106, %p107
      %p109 = scmp.ne.s32.totalorder %s98, %s99
      %p110 = scmp.eq.s32.totalorder %s22, 0
      %p111 = por %p109, %p110
      %p112 = scmp.ne.s32.totalorder %s98, %s99
      %p113 = scmp.eq.s32.totalorder %s23, 2
      %p114 = por %p112, %p113
      %p116 = scmp.ne.s32.totalorder %s99, %s115
      %p117 = scmp.eq.s32.totalorder %s23, 0
      %p118 = por %p116, %p117
      %p119 = scmp.le.s32.totalorder 1, %s17
      %p120 = scmp.lt.s32.totalorder %s17, 4
      %p121 = pnand %p119, %p120
      %p122 = pneg %p121
      // Predicated region
      $region9: #{tpu_custom_call.1} parent=5 // pred_check
        _
      $region10: #{tpu_custom_call.1} parent=5 // pred_check_branch
        %124 = sbr.rel (%p121) target = $region12
      $region11: #{tpu_custom_call.1} parent=5 // pred_region
        %s125 = ssub.s32 %s17, 1
        // Predicated region
        $region13: #{tpu_custom_call.1} parent=11 // pred_check
          %p126 = pneg %p64
        $region14: #{tpu_custom_call.1} parent=11 // pred_check_branch
          %128 = sbr.rel (%p126) target = $region16
        $region15: #{tpu_custom_call.1} parent=11 // pred_region
          %s130 = ssub.s32 112, 112
          %131 = vsyncadd [#allocation7], %s130
          %s133 = sshll.u32 [#allocation6], 4
          %s134 = int_to_ptr.vmem [resolvable:$true] %s133
          %136 = dma.hbm_to_vmem [thread:$0]  %s1, 112, %s134, [#allocation7]
        $region16: #{tpu_custom_call.1} parent=11 // pred_fallthru
          _
        // Predicated region
        $region17: #{tpu_custom_call.1} parent=11 // pred_check
          %p137 = pneg %p85
        $region18: #{tpu_custom_call.1} parent=11 // pred_check_branch
          %139 = sbr.rel (%p137) target = $region20
        $region19: #{tpu_custom_call.1} parent=11 // pred_region
          _
        $region20: #{tpu_custom_call.1} parent=11 // pred_fallthru
          _
      $region12: #{tpu_custom_call.1} parent=5 // pred_fallthru
        _
      %p140 = scmp.lt.s32.totalorder %s17, 3
      // Predicated region
      $region21: #{tpu_custom_call.1} parent=5 // pred_check
        %p141 = pneg %p140
      $region22: #{tpu_custom_call.1} parent=5 // pred_check_branch
        %143 = sbr.rel (%p141) target = $region24
      $region23: #{tpu_custom_call.1} parent=5 // pred_region
        // Predicated region
        $region25: #{tpu_custom_call.1} parent=23 // pred_check
          %p144 = pneg %p37
        $region26: #{tpu_custom_call.1} parent=23 // pred_check_branch
          %146 = sbr.rel (%p144) target = $region28
        $region27: #{tpu_custom_call.1} parent=23 // pred_region
          %s147 = sand.u32 %s27, 1
          %s148 = scalar_lea.sflag [#allocation4], %s147
          %s149 = sand.u32 %s27, 1
          %s150 = smul.addr %s149, 896
          %s151 = scalar_lea.vmem [#allocation3], %s150
          %s152 = smul.u32 16, %s17
          %s153 = ssub.s32 38, %s152
          %p154 = scmp.lt.s32.totalorder %s153, 16
          %s155 = scalar_select %p154, %s153, 16
          %s156 = smul.u32 128, %s155
          %s157 = smul.u32 %s156, 7
          %s159 = ssub.s32 14336, %s157
          %160 = vsyncadd %s148, %s159
          %p161 = scmp.ne.s32.totalorder 0, %s157
          %s162 = smul.addr %s152, 7
          %s163 = smul.addr %s162, 128
          %s164 = scalar_lea.hbm %s0, %s163
          %s165 = smul.u32 56, %s155
          %s166 = sshll.u32 %s151, 4
          %s167 = int_to_ptr.vmem [resolvable:$true] %s166
          %s168 = sshll.u32 %s165, 4
          %172 = dma.hbm_to_vmem [thread:$0]  (%p161), %s164, %s168, %s167, %s148, 896, 896, 56
        $region28: #{tpu_custom_call.1} parent=23 // pred_fallthru
          _
      $region24: #{tpu_custom_call.1} parent=5 // pred_fallthru
        _
      %p173 = scmp.le.s32.totalorder 1, %s17
      %p174 = scmp.lt.s32.totalorder %s17, 4
      %p175 = pnand %p173, %p174
      %p176 = pneg %p175
      // Predicated region
      $region29: #{tpu_custom_call.1} parent=5 // pred_check
        _
      $region30: #{tpu_custom_call.1} parent=5 // pred_check_branch
        %178 = sbr.rel (%p175) target = $region32
      $region31: #{tpu_custom_call.1} parent=5 // pred_region
        %s179 = ssub.s32 %s17, 1
        %s180 = sand.u32 %s30, 1
        %s181 = scalar_lea.sflag [#allocation4], %s180
        %s182 = sand.u32 %s30, 1
        %s183 = smul.addr %s182, 896
        %s184 = scalar_lea.vmem [#allocation3], %s183
        // Predicated region
        $region33: #{tpu_custom_call.1} parent=31 // pred_check
          %p185 = pneg %p43
        $region34: #{tpu_custom_call.1} parent=31 // pred_check_branch
          %187 = sbr.rel (%p185) target = $region36
        $region35: #{tpu_custom_call.1} parent=31 // pred_region
          %188 = dma.done %s181, 14336
        $region36: #{tpu_custom_call.1} parent=31 // pred_fallthru
          _
        // Predicated region
        $region37: #{tpu_custom_call.1} parent=31 // pred_check
          %p189 = pneg %p64
        $region38: #{tpu_custom_call.1} parent=31 // pred_check_branch
          %191 = sbr.rel (%p189) target = $region40
        $region39: #{tpu_custom_call.1} parent=31 // pred_region
          %192 = dma.done [#allocation7], 112
        $region40: #{tpu_custom_call.1} parent=31 // pred_fallthru
          _
        %s193 = sand.u32 %s30, 1
        %s194 = scalar_lea.sflag [#allocation4], %s193
        %s195 = sand.u32 %s30, 1
        %s196 = smul.addr %s195, 896
        %s197 = scalar_lea.vmem [#allocation3], %s196
        %p198 = pneg %p43
        %p199 = pneg %p40
        %p200 = pneg %p64
        %p201 = pneg %p61
        %p202 = pneg %p85
        %p203 = pneg %p82
        %p204 = pneg %p111
        %p205 = pneg %p108
        %s206 = sand.u32 %s98, 1
        %s207 = scalar_lea.sflag [#allocation5], %s206
        %s208 = sand.u32 %s98, 1
        %s209 = scalar_lea.vmem [#allocation8], %s208
        %s210 = smul.u32 16, %s22
        %s211 = ssub.s32 38, %s210
        %p212 = scmp.lt.s32.totalorder %s211, 16
        %s213 = scalar_select %p212, %s211, 16
        %s214 = smul.u32 128, %s213
        %s215 = smul.u32 %s214, 7
        %v216 = vld [vmem:[%s184] sm:$0xff]
        %v217 = vld [vmem:[%s184 + $0x8] sm:$0xff]
        %v218 = vld [vmem:[%s184 + $0x10] sm:$0xff]
        %v219 = vld [vmem:[%s184 + $0x18] sm:$0xff]
        %v220 = vld [vmem:[%s184 + $0x20] sm:$0xff]
        %v221 = vld [vmem:[%s184 + $0x28] sm:$0xff]
        %v222 = vld [vmem:[%s184 + $0x30] sm:$0xff]
        %v223 = vld [vmem:[%s184 + $0x38] sm:$0xff]
        %v224 = vld [vmem:[%s184 + $0x40] sm:$0xff]
        %v225 = vld [vmem:[%s184 + $0x48] sm:$0xff]
        %v226 = vld [vmem:[%s184 + $0x50] sm:$0xff]
        %v227 = vld [vmem:[%s184 + $0x58] sm:$0xff]
        %v228 = vld [vmem:[%s184 + $0x60] sm:$0xff]
        %v229 = vld [vmem:[%s184 + $0x68] sm:$0xff]
        %v230 = vld [vmem:[%s184 + $0x70] sm:$0xff]
        %v231 = vld [vmem:[%s184 + $0x78] sm:$0xff]
        %v232 = vld [vmem:[%s184 + $0x80] sm:$0xff]
        %v233 = vld [vmem:[%s184 + $0x88] sm:$0xff]
        %v234 = vld [vmem:[%s184 + $0x90] sm:$0xff]
        %v235 = vld [vmem:[%s184 + $0x98] sm:$0xff]
        %v236 = vld [vmem:[%s184 + $0xa0] sm:$0xff]
        %v237 = vld [vmem:[%s184 + $0xa8] sm:$0xff]
        %v238 = vld [vmem:[%s184 + $0xb0] sm:$0xff]
        %v239 = vld [vmem:[%s184 + $0xb8] sm:$0xff]
        %v240 = vld [vmem:[%s184 + $0xc0] sm:$0xff]
        %v241 = vld [vmem:[%s184 + $0xc8] sm:$0xff]
        %v242 = vld [vmem:[%s184 + $0xd0] sm:$0xff]
        %v243 = vld [vmem:[%s184 + $0xd8] sm:$0xff]
        %v244 = vld [vmem:[%s184 + $0xe0] sm:$0xff]
        %v245 = vld [vmem:[%s184 + $0xe8] sm:$0xff]
        %v246 = vld [vmem:[%s184 + $0xf0] sm:$0xff]
        %v247 = vld [vmem:[%s184 + $0xf8] sm:$0xff]
        %v248 = vld [vmem:[%s184 + $0x100] sm:$0xff]
        %v249 = vld [vmem:[%s184 + $0x108] sm:$0xff]
        %v250 = vld [vmem:[%s184 + $0x110] sm:$0xff]
        %v251 = vld [vmem:[%s184 + $0x118] sm:$0xff]
        %v252 = vld [vmem:[%s184 + $0x120] sm:$0xff]
        %v253 = vld [vmem:[%s184 + $0x128] sm:$0xff]
        %v254 = vld [vmem:[%s184 + $0x130] sm:$0xff]
        %v255 = vld [vmem:[%s184 + $0x138] sm:$0xff]
        %v256 = vld [vmem:[%s184 + $0x140] sm:$0xff]
        %v257 = vld [vmem:[%s184 + $0x148] sm:$0xff]
        %v258 = vld [vmem:[%s184 + $0x150] sm:$0xff]
        %v259 = vld [vmem:[%s184 + $0x158] sm:$0xff]
        %v260 = vld [vmem:[%s184 + $0x160] sm:$0xff]
        %v261 = vld [vmem:[%s184 + $0x168] sm:$0xff]
        %v262 = vld [vmem:[%s184 + $0x170] sm:$0xff]
        %v263 = vld [vmem:[%s184 + $0x178] sm:$0xff]
        %v264 = vld [vmem:[%s184 + $0x180] sm:$0xff]
        %v265 = vld [vmem:[%s184 + $0x188] sm:$0xff]
        %v266 = vld [vmem:[%s184 + $0x190] sm:$0xff]
        %v267 = vld [vmem:[%s184 + $0x198] sm:$0xff]
        %v268 = vld [vmem:[%s184 + $0x1a0] sm:$0xff]
        %v269 = vld [vmem:[%s184 + $0x1a8] sm:$0xff]
        %v270 = vld [vmem:[%s184 + $0x1b0] sm:$0xff]
        %v271 = vld [vmem:[%s184 + $0x1b8] sm:$0xff]
        %v272 = vld [vmem:[%s184 + $0x1c0] sm:$0xff]
        %v273 = vld [vmem:[%s184 + $0x1c8] sm:$0xff]
        %v274 = vld [vmem:[%s184 + $0x1d0] sm:$0xff]
        %v275 = vld [vmem:[%s184 + $0x1d8] sm:$0xff]
        %v276 = vld [vmem:[%s184 + $0x1e0] sm:$0xff]
        %v277 = vld [vmem:[%s184 + $0x1e8] sm:$0xff]
        %v278 = vld [vmem:[%s184 + $0x1f0] sm:$0xff]
        %v279 = vld [vmem:[%s184 + $0x1f8] sm:$0xff]
        %v280 = vld [vmem:[%s184 + $0x200] sm:$0xff]
        %v281 = vld [vmem:[%s184 + $0x208] sm:$0xff]
        %v282 = vld [vmem:[%s184 + $0x210] sm:$0xff]
        %v283 = vld [vmem:[%s184 + $0x218] sm:$0xff]
        %v284 = vld [vmem:[%s184 + $0x220] sm:$0xff]
        %v285 = vld [vmem:[%s184 + $0x228] sm:$0xff]
        %v286 = vld [vmem:[%s184 + $0x230] sm:$0xff]
        %v287 = vld [vmem:[%s184 + $0x238] sm:$0xff]
        %v288 = vld [vmem:[%s184 + $0x240] sm:$0xff]
        %v289 = vld [vmem:[%s184 + $0x248] sm:$0xff]
        %v290 = vld [vmem:[%s184 + $0x250] sm:$0xff]
        %v291 = vld [vmem:[%s184 + $0x258] sm:$0xff]
        %v292 = vld [vmem:[%s184 + $0x260] sm:$0xff]
        %v293 = vld [vmem:[%s184 + $0x268] sm:$0xff]
        %v294 = vld [vmem:[%s184 + $0x270] sm:$0xff]
        %v295 = vld [vmem:[%s184 + $0x278] sm:$0xff]
        %v296 = vld [vmem:[%s184 + $0x280] sm:$0xff]
        %v297 = vld [vmem:[%s184 + $0x288] sm:$0xff]
        %v298 = vld [vmem:[%s184 + $0x290] sm:$0xff]
        %v299 = vld [vmem:[%s184 + $0x298] sm:$0xff]
        %v300 = vld [vmem:[%s184 + $0x2a0] sm:$0xff]
        %v301 = vld [vmem:[%s184 + $0x2a8] sm:$0xff]
        %v302 = vld [vmem:[%s184 + $0x2b0] sm:$0xff]
        %v303 = vld [vmem:[%s184 + $0x2b8] sm:$0xff]
        %v304 = vld [vmem:[%s184 + $0x2c0] sm:$0xff]
        %v305 = vld [vmem:[%s184 + $0x2c8] sm:$0xff]
        %v306 = vld [vmem:[%s184 + $0x2d0] sm:$0xff]
        %v307 = vld [vmem:[%s184 + $0x2d8] sm:$0xff]
        %v308 = vld [vmem:[%s184 + $0x2e0] sm:$0xff]
        %v309 = vld [vmem:[%s184 + $0x2e8] sm:$0xff]
        %v310 = vld [vmem:[%s184 + $0x2f0] sm:$0xff]
        %v311 = vld [vmem:[%s184 + $0x2f8] sm:$0xff]
        %v312 = vld [vmem:[%s184 + $0x300] sm:$0xff]
        %v313 = vld [vmem:[%s184 + $0x308] sm:$0xff]
        %v314 = vld [vmem:[%s184 + $0x310] sm:$0xff]
        %v315 = vld [vmem:[%s184 + $0x318] sm:$0xff]
        %v316 = vld [vmem:[%s184 + $0x320] sm:$0xff]
        %v317 = vld [vmem:[%s184 + $0x328] sm:$0xff]
        %v318 = vld [vmem:[%s184 + $0x330] sm:$0xff]
        %v319 = vld [vmem:[%s184 + $0x338] sm:$0xff]
        %v320 = vld [vmem:[%s184 + $0x340] sm:$0xff]
        %v321 = vld [vmem:[%s184 + $0x348] sm:$0xff]
        %v322 = vld [vmem:[%s184 + $0x350] sm:$0xff]
        %v323 = vld [vmem:[%s184 + $0x358] sm:$0xff]
        %v324 = vld [vmem:[%s184 + $0x360] sm:$0xff]
        %v325 = vld [vmem:[%s184 + $0x368] sm:$0xff]
        %v326 = vld [vmem:[%s184 + $0x370] sm:$0xff]
        %v327 = vld [vmem:[%s184 + $0x378] sm:$0xff]
        %v328 = vld [vmem:[#allocation6] sm:$0x7f]
        %v330 = vlaneseq
        %v331 = vshrl.u32 %v330, 7
        %v332 = vsub.s32 0, %v331
        %v333 = vrot.slane %v328, %v332
        %v334 = vlaneseq
        %v335 = vshrl.u32 %v334, 7
        %v336 = vsub.s32 1, %v335
        %v337 = vrot.slane %v328, %v336
        %v338 = vlaneseq
        %v339 = vshrl.u32 %v338, 7
        %v340 = vsub.s32 2, %v339
        %v341 = vrot.slane %v328, %v340
        %v342 = vlaneseq
        %v343 = vshrl.u32 %v342, 7
        %v344 = vsub.s32 3, %v343
        %v345 = vrot.slane %v328, %v344
        %v346 = vlaneseq
        %v347 = vshrl.u32 %v346, 7
        %v348 = vsub.s32 4, %v347
        %v349 = vrot.slane %v328, %v348
        %v350 = vlaneseq
        %v351 = vshrl.u32 %v350, 7
        %v352 = vsub.s32 5, %v351
        %v353 = vrot.slane %v328, %v352
        %v354 = vlaneseq
        %v355 = vshrl.u32 %v354, 7
        %v356 = vsub.s32 6, %v355
        %v357 = vrot.slane %v328, %v356
        %v365 = vmul.f32 %v216, %v333
        %v366 = vmul.f32 %v217, %v337
        %v367 = vmul.f32 %v218, %v341
        %v368 = vmul.f32 %v219, %v345
        %v369 = vmul.f32 %v220, %v349
        %v370 = vmul.f32 %v221, %v353
        %v371 = vmul.f32 %v222, %v357
        %v372 = vmul.f32 %v223, %v333
        %v373 = vmul.f32 %v224, %v337
        %v374 = vmul.f32 %v225, %v341
        %v375 = vmul.f32 %v226, %v345
        %v376 = vmul.f32 %v227, %v349
        %v377 = vmul.f32 %v228, %v353
        %v378 = vmul.f32 %v229, %v357
        %v379 = vmul.f32 %v230, %v333
        %v380 = vmul.f32 %v231, %v337
        %v381 = vmul.f32 %v232, %v341
        %v382 = vmul.f32 %v233, %v345
        %v383 = vmul.f32 %v234, %v349
        %v384 = vmul.f32 %v235, %v353
        %v385 = vmul.f32 %v236, %v357
        %v386 = vmul.f32 %v237, %v333
        %v387 = vmul.f32 %v238, %v337
        %v388 = vmul.f32 %v239, %v341
        %v389 = vmul.f32 %v240, %v345
        %v390 = vmul.f32 %v241, %v349
        %v391 = vmul.f32 %v242, %v353
        %v392 = vmul.f32 %v243, %v357
        %v393 = vmul.f32 %v244, %v333
        %v394 = vmul.f32 %v245, %v337
        %v395 = vmul.f32 %v246, %v341
        %v396 = vmul.f32 %v247, %v345
        %v397 = vmul.f32 %v248, %v349
        %v398 = vmul.f32 %v249, %v353
        %v399 = vmul.f32 %v250, %v357
        %v400 = vmul.f32 %v251, %v333
        %v401 = vmul.f32 %v252, %v337
        %v402 = vmul.f32 %v253, %v341
        %v403 = vmul.f32 %v254, %v345
        %v404 = vmul.f32 %v255, %v349
        %v405 = vmul.f32 %v256, %v353
        %v406 = vmul.f32 %v257, %v357
        %v407 = vmul.f32 %v258, %v333
        %v408 = vmul.f32 %v259, %v337
        %v409 = vmul.f32 %v260, %v341
        %v410 = vmul.f32 %v261, %v345
        %v411 = vmul.f32 %v262, %v349
        %v412 = vmul.f32 %v263, %v353
        %v413 = vmul.f32 %v264, %v357
        %v414 = vmul.f32 %v265, %v333
        %v415 = vmul.f32 %v266, %v337
        %v416 = vmul.f32 %v267, %v341
        %v417 = vmul.f32 %v268, %v345
        %v418 = vmul.f32 %v269, %v349
        %v419 = vmul.f32 %v270, %v353
        %v420 = vmul.f32 %v271, %v357
        %v421 = vmul.f32 %v272, %v333
        %v422 = vmul.f32 %v273, %v337
        %v423 = vmul.f32 %v274, %v341
        %v424 = vmul.f32 %v275, %v345
        %v425 = vmul.f32 %v276, %v349
        %v426 = vmul.f32 %v277, %v353
        %v427 = vmul.f32 %v278, %v357
        %v428 = vmul.f32 %v279, %v333
        %v429 = vmul.f32 %v280, %v337
        %v430 = vmul.f32 %v281, %v341
        %v431 = vmul.f32 %v282, %v345
        %v432 = vmul.f32 %v283, %v349
        %v433 = vmul.f32 %v284, %v353
        %v434 = vmul.f32 %v285, %v357
        %v435 = vmul.f32 %v286, %v333
        %v436 = vmul.f32 %v287, %v337
        %v437 = vmul.f32 %v288, %v341
        %v438 = vmul.f32 %v289, %v345
        %v439 = vmul.f32 %v290, %v349
        %v440 = vmul.f32 %v291, %v353
        %v441 = vmul.f32 %v292, %v357
        %v442 = vmul.f32 %v293, %v333
        %v443 = vmul.f32 %v294, %v337
        %v444 = vmul.f32 %v295, %v341
        %v445 = vmul.f32 %v296, %v345
        %v446 = vmul.f32 %v297, %v349
        %v447 = vmul.f32 %v298, %v353
        %v448 = vmul.f32 %v299, %v357
        %v449 = vmul.f32 %v300, %v333
        %v450 = vmul.f32 %v301, %v337
        %v451 = vmul.f32 %v302, %v341
        %v452 = vmul.f32 %v303, %v345
        %v453 = vmul.f32 %v304, %v349
        %v454 = vmul.f32 %v305, %v353
        %v455 = vmul.f32 %v306, %v357
        %v456 = vmul.f32 %v307, %v333
        %v457 = vmul.f32 %v308, %v337
        %v458 = vmul.f32 %v309, %v341
        %v459 = vmul.f32 %v310, %v345
        %v460 = vmul.f32 %v311, %v349
        %v461 = vmul.f32 %v312, %v353
        %v462 = vmul.f32 %v313, %v357
        %v463 = vmul.f32 %v314, %v333
        %v464 = vmul.f32 %v315, %v337
        %v465 = vmul.f32 %v316, %v341
        %v466 = vmul.f32 %v317, %v345
        %v467 = vmul.f32 %v318, %v349
        %v468 = vmul.f32 %v319, %v353
        %v469 = vmul.f32 %v320, %v357
        %v470 = vmul.f32 %v321, %v333
        %v471 = vmul.f32 %v322, %v337
        %v472 = vmul.f32 %v323, %v341
        %v473 = vmul.f32 %v324, %v345
        %v474 = vmul.f32 %v325, %v349
        %v475 = vmul.f32 %v326, %v353
        %v476 = vmul.f32 %v327, %v357
        %v477 = vadd.f32 %v365, %v366
        %v478 = vadd.f32 %v477, %v367
        %v479 = vadd.f32 %v478, %v368
        %v480 = vadd.f32 %v479, %v369
        %v481 = vadd.f32 %v480, %v370
        %vm482 = vcmask 130048
        %v483 = vsel %vm482, %v371, 0.0
        %v484 = vadd.f32 %v481, %v483
        %485 = vadd.xlane.f32.xlu0 %v484
        %v486 = vpop.xlane.xlu0 %485
        %v487 = vadd.f32 %v372, %v373
        %v488 = vadd.f32 %v487, %v374
        %v489 = vadd.f32 %v488, %v375
        %v490 = vadd.f32 %v489, %v376
        %v491 = vadd.f32 %v490, %v377
        %v492 = vsel %vm482, %v378, 0.0
        %v493 = vadd.f32 %v491, %v492
        %494 = vadd.xlane.f32.xlu0 %v493
        %v495 = vpop.xlane.xlu0 %494
        %v496 = vadd.f32 %v379, %v380
        %v497 = vadd.f32 %v496, %v381
        %v498 = vadd.f32 %v497, %v382
        %v499 = vadd.f32 %v498, %v383
        %v500 = vadd.f32 %v499, %v384
        %v501 = vsel %vm482, %v385, 0.0
        %v502 = vadd.f32 %v500, %v501
        %503 = vadd.xlane.f32.xlu0 %v502
        %v504 = vpop.xlane.xlu0 %503
        %v505 = vadd.f32 %v386, %v387
        %v506 = vadd.f32 %v505, %v388
        %v507 = vadd.f32 %v506, %v389
        %v508 = vadd.f32 %v507, %v390
        %v509 = vadd.f32 %v508, %v391
        %v510 = vsel %vm482, %v392, 0.0
        %v511 = vadd.f32 %v509, %v510
        %512 = vadd.xlane.f32.xlu0 %v511
        %v513 = vpop.xlane.xlu0 %512
        %v514 = vadd.f32 %v393, %v394
        %v515 = vadd.f32 %v514, %v395
        %v516 = vadd.f32 %v515, %v396
        %v517 = vadd.f32 %v516, %v397
        %v518 = vadd.f32 %v517, %v398
        %v519 = vsel %vm482, %v399, 0.0
        %v520 = vadd.f32 %v518, %v519
        %521 = vadd.xlane.f32.xlu0 %v520
        %v522 = vpop.xlane.xlu0 %521
        %v523 = vadd.f32 %v400, %v401
        %v524 = vadd.f32 %v523, %v402
        %v525 = vadd.f32 %v524, %v403
        %v526 = vadd.f32 %v525, %v404
        %v527 = vadd.f32 %v526, %v405
        %v528 = vsel %vm482, %v406, 0.0
        %v529 = vadd.f32 %v527, %v528
        %530 = vadd.xlane.f32.xlu0 %v529
        %v531 = vpop.xlane.xlu0 %530
        %v532 = vadd.f32 %v407, %v408
        %v533 = vadd.f32 %v532, %v409
        %v534 = vadd.f32 %v533, %v410
        %v535 = vadd.f32 %v534, %v411
        %v536 = vadd.f32 %v535, %v412
        %v537 = vsel %vm482, %v413, 0.0
        %v538 = vadd.f32 %v536, %v537
        %539 = vadd.xlane.f32.xlu0 %v538
        %v540 = vpop.xlane.xlu0 %539
        %v541 = vadd.f32 %v414, %v415
        %v542 = vadd.f32 %v541, %v416
        %v543 = vadd.f32 %v542, %v417
        %v544 = vadd.f32 %v543, %v418
        %v545 = vadd.f32 %v544, %v419
        %v546 = vsel %vm482, %v420, 0.0
        %v547 = vadd.f32 %v545, %v546
        %548 = vadd.xlane.f32.xlu0 %v547
        %v549 = vpop.xlane.xlu0 %548
        %v550 = vadd.f32 %v421, %v422
        %v551 = vadd.f32 %v550, %v423
        %v552 = vadd.f32 %v551, %v424
        %v553 = vadd.f32 %v552, %v425
        %v554 = vadd.f32 %v553, %v426
        %v555 = vsel %vm482, %v427, 0.0
        %v556 = vadd.f32 %v554, %v555
        %557 = vadd.xlane.f32.xlu0 %v556
        %v558 = vpop.xlane.xlu0 %557
        %v559 = vadd.f32 %v428, %v429
        %v560 = vadd.f32 %v559, %v430
        %v561 = vadd.f32 %v560, %v431
        %v562 = vadd.f32 %v561, %v432
        %v563 = vadd.f32 %v562, %v433
        %v564 = vsel %vm482, %v434, 0.0
        %v565 = vadd.f32 %v563, %v564
        %566 = vadd.xlane.f32.xlu0 %v565
        %v567 = vpop.xlane.xlu0 %566
        %v568 = vadd.f32 %v435, %v436
        %v569 = vadd.f32 %v568, %v437
        %v570 = vadd.f32 %v569, %v438
        %v571 = vadd.f32 %v570, %v439
        %v572 = vadd.f32 %v571, %v440
        %v573 = vsel %vm482, %v441, 0.0
        %v574 = vadd.f32 %v572, %v573
        %575 = vadd.xlane.f32.xlu0 %v574
        %v576 = vpop.xlane.xlu0 %575
        %v577 = vadd.f32 %v442, %v443
        %v578 = vadd.f32 %v577, %v444
        %v579 = vadd.f32 %v578, %v445
        %v580 = vadd.f32 %v579, %v446
        %v581 = vadd.f32 %v580, %v447
        %v582 = vsel %vm482, %v448, 0.0
        %v583 = vadd.f32 %v581, %v582
        %584 = vadd.xlane.f32.xlu0 %v583
        %v585 = vpop.xlane.xlu0 %584
        %v586 = vadd.f32 %v449, %v450
        %v587 = vadd.f32 %v586, %v451
        %v588 = vadd.f32 %v587, %v452
        %v589 = vadd.f32 %v588, %v453
        %v590 = vadd.f32 %v589, %v454
        %v591 = vsel %vm482, %v455, 0.0
        %v592 = vadd.f32 %v590, %v591
        %593 = vadd.xlane.f32.xlu0 %v592
        %v594 = vpop.xlane.xlu0 %593
        %v595 = vadd.f32 %v456, %v457
        %v596 = vadd.f32 %v595, %v458
        %v597 = vadd.f32 %v596, %v459
        %v598 = vadd.f32 %v597, %v460
        %v599 = vadd.f32 %v598, %v461
        %v600 = vsel %vm482, %v462, 0.0
        %v601 = vadd.f32 %v599, %v600
        %602 = vadd.xlane.f32.xlu0 %v601
        %v603 = vpop.xlane.xlu0 %602
        %v604 = vadd.f32 %v463, %v464
        %v605 = vadd.f32 %v604, %v465
        %v606 = vadd.f32 %v605, %v466
        %v607 = vadd.f32 %v606, %v467
        %v608 = vadd.f32 %v607, %v468
        %v609 = vsel %vm482, %v469, 0.0
        %v610 = vadd.f32 %v608, %v609
        %611 = vadd.xlane.f32.xlu0 %v610
        %v612 = vpop.xlane.xlu0 %611
        %v613 = vadd.f32 %v470, %v471
        %v614 = vadd.f32 %v613, %v472
        %v615 = vadd.f32 %v614, %v473
        %v616 = vadd.f32 %v615, %v474
        %v617 = vadd.f32 %v616, %v475
        %v618 = vsel %vm482, %v476, 0.0
        %v619 = vadd.f32 %v617, %v618
        %620 = vadd.xlane.f32.xlu0 %v619
        %v621 = vpop.xlane.xlu0 %620
        %s622 = sld [smem:[#allocation2]]
        %v623 = vstv %s622
        %v624 = vadd.f32 %v486, %v623
        %v625 = vadd.f32 %v495, %v623
        %v626 = vadd.f32 %v504, %v623
        %v627 = vadd.f32 %v513, %v623
        %v628 = vadd.f32 %v522, %v623
        %v629 = vadd.f32 %v531, %v623
        %v630 = vadd.f32 %v540, %v623
        %v631 = vadd.f32 %v549, %v623
        %v632 = vadd.f32 %v558, %v623
        %v633 = vadd.f32 %v567, %v623
        %v634 = vadd.f32 %v576, %v623
        %v635 = vadd.f32 %v585, %v623
        %v636 = vadd.f32 %v594, %v623
        %v637 = vadd.f32 %v603, %v623
        %v638 = vadd.f32 %v612, %v623
        %v639 = vadd.f32 %v621, %v623
        %v640 = vmax.f32 %v624, 0.0
        %v641 = vmax.f32 %v625, 0.0
        %v642 = vmax.f32 %v626, 0.0
        %v643 = vmax.f32 %v627, 0.0
        %v644 = vmax.f32 %v628, 0.0
        %v645 = vmax.f32 %v629, 0.0
        %v646 = vmax.f32 %v630, 0.0
        %v647 = vmax.f32 %v631, 0.0
        %v648 = vmax.f32 %v632, 0.0
        %v649 = vmax.f32 %v633, 0.0
        %v650 = vmax.f32 %v634, 0.0
        %v651 = vmax.f32 %v635, 0.0
        %v652 = vmax.f32 %v636, 0.0
        %v653 = vmax.f32 %v637, 0.0
        %v654 = vmax.f32 %v638, 0.0
        %v655 = vmax.f32 %v639, 0.0
        %v672 = vlaneseq
        %v673 = vand.u32 %v672, 127
        %v674 = vlaneseq
        %v675 = vshrl.u32 %v674, 7
        %v676 = vsub.s32 %v673, %v675
        %v677 = vrot.slane %v640, %v676
        %v678 = vadd.s32 %v673, 4294967288
        %v679 = vlaneseq
        %v680 = vshrl.u32 %v679, 7
        %v681 = vsub.s32 %v678, %v680
        %v682 = vrot.slane %v641, %v681
        %vm683 = vcmask 130112
        %v684 = vsel %vm683, %v682, %v677
        %v685 = vadd.s32 %v673, 4294967280
        %v686 = vlaneseq
        %v687 = vshrl.u32 %v686, 7
        %v688 = vsub.s32 %v685, %v687
        %v689 = vrot.slane %v642, %v688
        %vm690 = vcmask 195712
        %v691 = vsel %vm690, %v689, %v684
        %v692 = vadd.s32 %v673, 4294967272
        %v693 = vlaneseq
        %v694 = vshrl.u32 %v693, 7
        %v695 = vsub.s32 %v692, %v694
        %v696 = vrot.slane %v643, %v695
        %vm697 = vcmask 261312
        %v698 = vsel %vm697, %v696, %v691
        %v699 = vadd.s32 %v673, 4294967264
        %v700 = vlaneseq
        %v701 = vshrl.u32 %v700, 7
        %v702 = vsub.s32 %v699, %v701
        %v703 = vrot.slane %v644, %v702
        %vm704 = vcmask 326912
        %v705 = vsel %vm704, %v703, %v698
        %v706 = vadd.s32 %v673, 4294967256
        %v707 = vlaneseq
        %v708 = vshrl.u32 %v707, 7
        %v709 = vsub.s32 %v706, %v708
        %v710 = vrot.slane %v645, %v709
        %vm711 = vcmask 392512
        %v712 = vsel %vm711, %v710, %v705
        %v713 = vadd.s32 %v673, 4294967248
        %v714 = vlaneseq
        %v715 = vshrl.u32 %v714, 7
        %v716 = vsub.s32 %v713, %v715
        %v717 = vrot.slane %v646, %v716
        %vm718 = vcmask 458112
        %v719 = vsel %vm718, %v717, %v712
        %v720 = vadd.s32 %v673, 4294967240
        %v721 = vlaneseq
        %v722 = vshrl.u32 %v721, 7
        %v723 = vsub.s32 %v720, %v722
        %v724 = vrot.slane %v647, %v723
        %vm725 = vcmask 523712
        %v726 = vsel %vm725, %v724, %v719
        %v727 = vadd.s32 %v673, 4294967232
        %v728 = vlaneseq
        %v729 = vshrl.u32 %v728, 7
        %v730 = vsub.s32 %v727, %v729
        %v731 = vrot.slane %v648, %v730
        %vm732 = vcmask 589312
        %v733 = vsel %vm732, %v731, %v726
        %v734 = vadd.s32 %v673, 4294967224
        %v735 = vlaneseq
        %v736 = vshrl.u32 %v735, 7
        %v737 = vsub.s32 %v734, %v736
        %v738 = vrot.slane %v649, %v737
        %vm739 = vcmask 654912
        %v740 = vsel %vm739, %v738, %v733
        %v741 = vadd.s32 %v673, 4294967216
        %v742 = vlaneseq
        %v743 = vshrl.u32 %v742, 7
        %v744 = vsub.s32 %v741, %v743
        %v745 = vrot.slane %v650, %v744
        %vm746 = vcmask 720512
        %v747 = vsel %vm746, %v745, %v740
        %v748 = vadd.s32 %v673, 4294967208
        %v749 = vlaneseq
        %v750 = vshrl.u32 %v749, 7
        %v751 = vsub.s32 %v748, %v750
        %v752 = vrot.slane %v651, %v751
        %vm753 = vcmask 786112
        %v754 = vsel %vm753, %v752, %v747
        %v755 = vadd.s32 %v673, 4294967200
        %v756 = vlaneseq
        %v757 = vshrl.u32 %v756, 7
        %v758 = vsub.s32 %v755, %v757
        %v759 = vrot.slane %v652, %v758
        %vm760 = vcmask 851712
        %v761 = vsel %vm760, %v759, %v754
        %v762 = vadd.s32 %v673, 4294967192
        %v763 = vlaneseq
        %v764 = vshrl.u32 %v763, 7
        %v765 = vsub.s32 %v762, %v764
        %v766 = vrot.slane %v653, %v765
        %vm767 = vcmask 917312
        %v768 = vsel %vm767, %v766, %v761
        %v769 = vadd.s32 %v673, 4294967184
        %v770 = vlaneseq
        %v771 = vshrl.u32 %v770, 7
        %v772 = vsub.s32 %v769, %v771
        %v773 = vrot.slane %v654, %v772
        %vm774 = vcmask 982912
        %v775 = vsel %vm774, %v773, %v768
        %v776 = vadd.s32 %v673, 4294967176
        %v777 = vlaneseq
        %v778 = vshrl.u32 %v777, 7
        %v779 = vsub.s32 %v776, %v778
        %v780 = vrot.slane %v655, %v779
        %vm781 = vcmask 1048512
        %v782 = vsel %vm781, %v780, %v775
        %784 = vst [vmem:[%s209] sm:$0x1] %v782
        %s785 = sand.u32 %s98, 1
        %s786 = scalar_lea.sflag [#allocation5], %s785
        %s787 = sand.u32 %s98, 1
        %s788 = scalar_lea.vmem [#allocation8], %s787
        // Predicated region
        $region41: #{tpu_custom_call.1} parent=31 // pred_check
          %p789 = pneg %p108
        $region42: #{tpu_custom_call.1} parent=31 // pred_check_branch
          %791 = sbr.rel (%p789) target = $region44
        $region43: #{tpu_custom_call.1} parent=31 // pred_region
          %s793 = ssub.s32 16, 16
          %794 = vsyncadd %s786, %s793
          %s795 = smul.addr %s22, 16
          %s796 = scalar_lea.hbm %s3, %s795
          %s798 = sshll.u32 %s788, 4
          %s799 = int_to_ptr.vmem [resolvable:$true] %s798
          %801 = dma.vmem_to_hbm [thread:$0]  %s799, 16, %s796, %s786
        $region44: #{tpu_custom_call.1} parent=31 // pred_fallthru
          _
      $region32: #{tpu_custom_call.1} parent=5 // pred_fallthru
        _
      %p802 = scmp.le.s32.totalorder 2, %s17
      // Predicated region
      $region45: #{tpu_custom_call.1} parent=5 // pred_check
        %p803 = pneg %p802
      $region46: #{tpu_custom_call.1} parent=5 // pred_check_branch
        %805 = sbr.rel (%p803) target = $region48
      $region47: #{tpu_custom_call.1} parent=5 // pred_region
        %s806 = ssub.s32 %s17, 2
        // Predicated region
        $region49: #{tpu_custom_call.1} parent=47 // pred_check
          %p807 = pneg %p114
        $region50: #{tpu_custom_call.1} parent=47 // pred_check_branch
          %809 = sbr.rel (%p807) target = $region52
        $region51: #{tpu_custom_call.1} parent=47 // pred_region
          %s810 = sand.u32 %s99, 1
          %s811 = scalar_lea.sflag [#allocation5], %s810
          %s812 = sand.u32 %s99, 1
          %s813 = scalar_lea.vmem [#allocation8], %s812
          %814 = dma.done %s811, 16
        $region52: #{tpu_custom_call.1} parent=47 // pred_fallthru
          _
      $region48: #{tpu_custom_call.1} parent=5 // pred_fallthru
        _
    $region6: #{tpu_custom_call.1} parent=1 // loop_footer
      %s21 = sadd.s32 1, %s17
    $region7: #{tpu_custom_call.1} parent=1 // loop_footer_branch
      %16 = sbr.rel target = $region3
    $region8: #{tpu_custom_call.1} parent=1 // loop_exit
      _
    %815 = vsyncpa [#allocation4], 1
    %s816 = scalar_lea.sflag [#allocation4], 1
    %817 = vsyncpa %s816, 1
    %818 = vsyncpa [#allocation7], 1
    %819 = vsyncpa [#allocation5], 1
    %s820 = scalar_lea.sflag [#allocation5], 1
    %821 = vsyncpa %s820, 1

</llo_original>
